<compile_context>
chip_gen: v7x
topology: tpu7x:2x2x1
jax: 0.10.0
libtpu: 0.0.40
codegen_flags: <defaults>
</compile_context>

<pallas_src>
import jax
import jax.numpy as jnp
from jax.experimental import pallas as pl
from jax.experimental.pallas import tpu as pltpu

EPS = 1e-5  # nn.LayerNorm default eps


def _maxpool_merge_kernel(x_ref, prm_ref, o_ref):
    # x_ref  : (bblk, S, cc)  input block (input dtype), S = 2*P
    # prm_ref: (4, P, 1) f32  rows = [w_even, w_odd, b_even, b_odd] along axis 0
    # o_ref  : (bblk, P, cc)  output block (input dtype)
    P = o_ref.shape[1]
    inv_S = 1.0 / float(2 * P)

    # Stride-2 sublane reads split the length axis into even/odd halves; together
    # they read the x block exactly once (no separate dense pass, no f32 scratch).
    x_e = x_ref[:, pl.ds(0, P, stride=2), :].astype(jnp.float32)
    x_o = x_ref[:, pl.ds(1, P, stride=2), :].astype(jnp.float32)

    # LayerNorm statistics over the full length axis S (independently per batch
    # row / channel lane). Two-pass form: no E[x^2]-E[x]^2 cancellation risk,
    # and (x - mean) is reused directly for the normalize step.
    mean = (jnp.sum(x_e, axis=1, keepdims=True)
            + jnp.sum(x_o, axis=1, keepdims=True)) * inv_S        # (bblk, 1, cc)
    d_e = x_e - mean
    d_o = x_o - mean
    var = (jnp.sum(d_e * d_e, axis=1, keepdims=True)
           + jnp.sum(d_o * d_o, axis=1, keepdims=True)) * inv_S   # biased var (torch LN)
    inv = jax.lax.rsqrt(var + EPS)                                # EUP slot

    prm = prm_ref[...]                                            # (4, P, 1) f32
    w_e = prm[0][None]                                            # (1, P, 1)
    w_o = prm[1][None]
    b_e = prm[2][None]
    b_o = prm[3][None]

    # Fused normalize + position-indexed affine + MaxPool1d(2,2) -> output store.
    y_e = (d_e * inv) * w_e + b_e
    y_o = (d_o * inv) * w_o + b_o
    o_ref[...] = jnp.maximum(y_e, y_o).astype(o_ref.dtype)


def _choose_tiles(B, S, CC, itemsize):
    """Pick (batch block, channel tile, vmem_limit_bytes) per TPU generation.

    Per-step VMEM footprint model (per x-block element):
      2x double-buffered input (itemsize) + double-buffered output (half the
      sublanes, so ~1x itemsize) + ~4 f32 block-sized intermediates in the
      fused kernel body.
    """
    try:
        vmem_cap = pltpu.get_tpu_info().vmem_capacity_bytes  # per TensorCore
    except Exception:
        vmem_cap = 64 * 1024 * 1024  # conservative fallback (v7x per-core size)

    # Scoped VMEM limit: generous on v5e/v6e (128 MiB physical) but never above
    # what v7x's 64 MiB-per-core can hold.
    vmem_limit = int(min(vmem_cap * 3 // 4, 64 * 1024 * 1024))
    # Total double-buffered footprint target (<= ~48 MiB works on every gen and
    # yields multi-MiB dense tiles, past the ~85%-of-roofline point).
    footprint_budget = int(min(vmem_cap * 11 // 20, 48 * 1024 * 1024))
    per_elem = 3 * itemsize + 4 * 4
    budget_elems = max(1, footprint_budget // per_elem)

    if CC % 128 == 0:
        # Largest 128-multiple divisor of CC whose single-batch-row tile fits the
        # budget: keeps every output store lane-dense (unmasked vst).
        m = CC // 128
        best = 1
        for d in range(1, m + 1):
            if m % d == 0 and S * 128 * d <= budget_elems:
                best = d
        cc_tile = 128 * best
    else:
        # Small / unaligned channel width: keep the full CC as one block
        # (block == full dim is always legal). Padding to 128 lanes in the
        # wrapper would add a full HBM copy of x — worse than masked stores here.
        cc_tile = CC

    bblk = max(1, min(B, budget_elems // max(1, S * cc_tile)))
    # Make sure at least one "parallel" grid axis has >= 2 blocks when possible,
    # so megacore parts (v7x: 2 TensorCores) can actually split the work.
    n_cc = CC // cc_tile
    n_b = -(-B // bblk)
    if B >= 2 and n_cc * n_b < 2:
        bblk = (B + 1) // 2
    return bblk, cc_tile, vmem_limit


def maxpool_merging(x, weight, bias, input_resolution):
    """x: (B, T, C); weight/bias: (2*C,). Returns (B, T//4, 2*C) in x.dtype."""
    T = input_resolution[0]
    B, L, C = x.shape
    assert L == T, "input feature has wrong size"
    assert T % 2 == 0, f"x size ({T}) is not even."
    CC = 2 * C
    # nn.LayerNorm(2*dim) is applied post-transpose on an axis of length T//2,
    # so the module is only well-defined when T//2 == 2*dim.
    assert T // 2 == CC, "module requires T//2 == 2*dim (LayerNorm applied post-transpose)"
    S = T // 2
    P = T // 4

    # even/odd split + channel concat == plain row-major reshape (free).
    x2 = jnp.reshape(x, (B, S, CC))

    # Affine params vary along the length axis (sublanes), constant across
    # channels (lanes). Pre-split into even/odd halves and pack compactly as
    # (4, P, 1) f32 (~16*P bytes) — DMA'd once, broadcast across lanes in-kernel.
    wf = weight.astype(jnp.float32)
    bf = bias.astype(jnp.float32)
    params = jnp.stack([wf[0::2], wf[1::2], bf[0::2], bf[1::2]], axis=0)[..., None]

    bblk, cc_tile, vmem_limit = _choose_tiles(B, S, CC, jnp.dtype(x.dtype).itemsize)
    # Channel axis OUTER, batch axis INNER (fastest): only x/out blocks move per
    # step; the params block index is constant so it is fetched exactly once.
    grid = (CC // cc_tile, pl.cdiv(B, bblk))

    # Note: if B % bblk != 0 the last batch block computes LN stats on padded
    # garbage rows; those rows stay confined (per-row stats) and their writes
    # are dropped by Pallas, so it is benign.
    out = pl.pallas_call(
        _maxpool_merge_kernel,
        out_shape=jax.ShapeDtypeStruct((B, P, CC), x.dtype),
        grid_spec=pltpu.PrefetchScalarGridSpec(
            num_scalar_prefetch=0,
            grid=grid,
            in_specs=[
                pl.BlockSpec((bblk, S, cc_tile), lambda cj, bi: (bi, 0, cj)),
                pl.BlockSpec((4, P, 1), lambda cj, bi: (0, 0, 0)),
            ],
            out_specs=pl.BlockSpec((bblk, P, cc_tile), lambda cj, bi: (bi, 0, cj)),
        ),
        compiler_params=pltpu.CompilerParams(
            # Plain "parallel" already lets megacore shard grid axes across the
            # v7x TensorCores; pltpu.CORE_PARALLEL on the batch axis is an option
            # there but "parallel" keeps this portable across v5e/v6e/v7x.
            dimension_semantics=("parallel", "parallel"),
            vmem_limit_bytes=vmem_limit,
        ),
    )(x2, params)
    return out


def reference(x, weight, bias, T):
    """Pure-JAX transcription of the PyTorch forward (for verification)."""
    B, L, C = x.shape
    x0 = x[:, 0::2, :]
    x1 = x[:, 1::2, :]
    xc = jnp.concatenate([x0, x1], axis=-1)            # (B, T/2, 2C)
    xt = jnp.transpose(xc, (0, 2, 1))                  # (B, 2C, T/2)
    mean = jnp.mean(xt, axis=-1, keepdims=True)
    var = jnp.mean((xt - mean) ** 2, axis=-1, keepdims=True)
    y = (xt - mean) / jnp.sqrt(var + EPS) * weight + bias
    z = jnp.max(jnp.reshape(y, (B, 2 * C, T // 4, 2)), axis=-1)   # MaxPool1d(2, 2)
    return jnp.transpose(z, (0, 2, 1))                 # (B, T/4, 2C)


if __name__ == "__main__":
    key = jax.random.PRNGKey(0)

    def run_case(B, dim, dtype, atol, rtol):
        T = 4 * dim                       # module constraint: T//2 == 2*dim
        kx, kw, kb = jax.random.split(jax.random.fold_in(key, dim), 3)
        x = jax.random.normal(kx, (B, T, dim), dtype=jnp.float32)
        weight = 1.0 + 0.1 * jax.random.normal(kw, (2 * dim,), dtype=jnp.float32)
        bias = 0.1 * jax.random.normal(kb, (2 * dim,), dtype=jnp.float32)
        xd = x.astype(dtype)
        out = maxpool_merging(xd, weight, bias, (T, 1))
        out = jax.block_until_ready(out)
        ref = reference(xd.astype(jnp.float32), weight, bias, T)
        assert out.shape == (B, T // 4, 2 * dim), out.shape
        assert out.dtype == dtype, out.dtype
        ok = jnp.allclose(out.astype(jnp.float32), ref, atol=atol, rtol=rtol)
        assert bool(ok), float(jnp.max(jnp.abs(out.astype(jnp.float32) - ref)))

    # Toy shapes consistent with the module (dim=4 -> T=16, CC=8).
    run_case(B=2, dim=4, dtype=jnp.float32, atol=1e-5, rtol=1e-5)
    # Lane-dense case (dim=64 -> CC=128 lanes), still small/fast.
    run_case(B=2, dim=64, dtype=jnp.float32, atol=1e-5, rtol=1e-5)
    # bf16 I/O path (stats still computed in f32 inside the kernel).
    run_case(B=2, dim=64, dtype=jnp.bfloat16, atol=5e-2, rtol=5e-2)
    print("KERNEL_OK")
</pallas_src>

<mosaic_0001>
module attributes {stable_mosaic.version = 11 : i64} {
  func.func @_maxpool_merge_kernel(%arg0: i32, %arg1: i32, %arg2: memref<1x8x8xf32, #tpu.memory_space<vmem>>, %arg3: memref<4x4x1xf32, #tpu.memory_space<vmem>>, %arg4: memref<1x4x8xf32, #tpu.memory_space<vmem>>) attributes {dimension_semantics = [#tpu.dimension_semantics<parallel>, #tpu.dimension_semantics<parallel>], iteration_bounds = array<i64: 1, 2>, scalar_prefetch = 0 : i64, scratch_operands = 0 : i64, tpu.core_type = #tpu.core_type<tc>, window_params = [{transform_indices = @transform_0, window_bounds = array<i64: 1, 8, 8>}, {pipeline_mode = #tpu.pipeline_mode<synchronous>, transform_indices = @transform_1, window_bounds = array<i64: 4, 4, 1>}, {transform_indices = @transform_2, window_bounds = array<i64: 1, 4, 8>}]} {
    %c0 = arith.constant 0 : index
    %c0_0 = arith.constant 0 : index
    %c0_1 = arith.constant 0 : index
    %0 = tpu.strided_load %arg2[%c0, %c0_0, %c0_1] {strides = array<i32: 1, 2, 1>} : memref<1x8x8xf32, #tpu.memory_space<vmem>>, vector<1x4x8xf32>
    %c0_2 = arith.constant 0 : index
    %c1 = arith.constant 1 : index
    %c0_3 = arith.constant 0 : index
    %1 = tpu.strided_load %arg2[%c0_2, %c1, %c0_3] {strides = array<i32: 1, 2, 1>} : memref<1x8x8xf32, #tpu.memory_space<vmem>>, vector<1x4x8xf32>
    %cst = arith.constant dense<0.000000e+00> : vector<1x8xf32>
    %2 = vector.multi_reduction <add>, %0, %cst [1] : vector<1x4x8xf32> to vector<1x8xf32>
    %3 = vector.shape_cast %2 : vector<1x8xf32> to vector<1x1x8xf32>
    %cst_4 = arith.constant dense<0.000000e+00> : vector<1x8xf32>
    %4 = vector.multi_reduction <add>, %1, %cst_4 [1] : vector<1x4x8xf32> to vector<1x8xf32>
    %5 = vector.shape_cast %4 : vector<1x8xf32> to vector<1x1x8xf32>
    %6 = arith.addf %3, %5 : vector<1x1x8xf32>
    %cst_5 = arith.constant 1.250000e-01 : f32
    %7 = vector.broadcast %cst_5 : f32 to vector<1x1x8xf32>
    %8 = arith.mulf %6, %7 : vector<1x1x8xf32>
    %9 = vector.broadcast %8 : vector<1x1x8xf32> to vector<1x4x8xf32>
    %10 = arith.subf %0, %9 : vector<1x4x8xf32>
    %11 = vector.broadcast %8 : vector<1x1x8xf32> to vector<1x4x8xf32>
    %12 = arith.subf %1, %11 : vector<1x4x8xf32>
    %13 = arith.mulf %10, %10 : vector<1x4x8xf32>
    %cst_6 = arith.constant dense<0.000000e+00> : vector<1x8xf32>
    %14 = vector.multi_reduction <add>, %13, %cst_6 [1] : vector<1x4x8xf32> to vector<1x8xf32>
    %15 = vector.shape_cast %14 : vector<1x8xf32> to vector<1x1x8xf32>
    %16 = arith.mulf %12, %12 : vector<1x4x8xf32>
    %cst_7 = arith.constant dense<0.000000e+00> : vector<1x8xf32>
    %17 = vector.multi_reduction <add>, %16, %cst_7 [1] : vector<1x4x8xf32> to vector<1x8xf32>
    %18 = vector.shape_cast %17 : vector<1x8xf32> to vector<1x1x8xf32>
    %19 = arith.addf %15, %18 : vector<1x1x8xf32>
    %cst_8 = arith.constant 1.250000e-01 : f32
    %20 = vector.broadcast %cst_8 : f32 to vector<1x1x8xf32>
    %21 = arith.mulf %19, %20 : vector<1x1x8xf32>
    %cst_9 = arith.constant 9.99999974E-6 : f32
    %22 = vector.broadcast %cst_9 : f32 to vector<1x1x8xf32>
    %23 = arith.addf %21, %22 : vector<1x1x8xf32>
    %24 = math.rsqrt %23 : vector<1x1x8xf32>
    %c0_10 = arith.constant 0 : index
    %c0_11 = arith.constant 0 : index
    %c0_12 = arith.constant 0 : index
    %25 = vector.load %arg3[%c0_10, %c0_11, %c0_12] : memref<4x4x1xf32, #tpu.memory_space<vmem>>, vector<4x4x1xf32>
    %26 = vector.extract_strided_slice %25 {offsets = [0, 0, 0], sizes = [1, 4, 1], strides = [1, 1, 1]} : vector<4x4x1xf32> to vector<1x4x1xf32>
    %27 = vector.shape_cast %26 : vector<1x4x1xf32> to vector<4x1xf32>
    %28 = vector.shape_cast %27 : vector<4x1xf32> to vector<1x4x1xf32>
    %29 = vector.extract_strided_slice %25 {offsets = [1, 0, 0], sizes = [1, 4, 1], strides = [1, 1, 1]} : vector<4x4x1xf32> to vector<1x4x1xf32>
    %30 = vector.shape_cast %29 : vector<1x4x1xf32> to vector<4x1xf32>
    %31 = vector.shape_cast %30 : vector<4x1xf32> to vector<1x4x1xf32>
    %32 = vector.extract_strided_slice %25 {offsets = [2, 0, 0], sizes = [1, 4, 1], strides = [1, 1, 1]} : vector<4x4x1xf32> to vector<1x4x1xf32>
    %33 = vector.shape_cast %32 : vector<1x4x1xf32> to vector<4x1xf32>
    %34 = vector.shape_cast %33 : vector<4x1xf32> to vector<1x4x1xf32>
    %35 = vector.extract_strided_slice %25 {offsets = [3, 0, 0], sizes = [1, 4, 1], strides = [1, 1, 1]} : vector<4x4x1xf32> to vector<1x4x1xf32>
    %36 = vector.shape_cast %35 : vector<1x4x1xf32> to vector<4x1xf32>
    %37 = vector.shape_cast %36 : vector<4x1xf32> to vector<1x4x1xf32>
    %38 = vector.broadcast %24 : vector<1x1x8xf32> to vector<1x4x8xf32>
    %39 = arith.mulf %10, %38 : vector<1x4x8xf32>
    %40 = vector.broadcast %28 : vector<1x4x1xf32> to vector<1x4x8xf32>
    %41 = arith.mulf %39, %40 : vector<1x4x8xf32>
    %42 = vector.broadcast %34 : vector<1x4x1xf32> to vector<1x4x8xf32>
    %43 = arith.addf %41, %42 : vector<1x4x8xf32>
    %44 = vector.broadcast %24 : vector<1x1x8xf32> to vector<1x4x8xf32>
    %45 = arith.mulf %12, %44 : vector<1x4x8xf32>
    %46 = vector.broadcast %31 : vector<1x4x1xf32> to vector<1x4x8xf32>
    %47 = arith.mulf %45, %46 : vector<1x4x8xf32>
    %48 = vector.broadcast %37 : vector<1x4x1xf32> to vector<1x4x8xf32>
    %49 = arith.addf %47, %48 : vector<1x4x8xf32>
    %50 = arith.maximumf %43, %49 : vector<1x4x8xf32>
    %c0_13 = arith.constant 0 : index
    %c0_14 = arith.constant 0 : index
    %c0_15 = arith.constant 0 : index
    %51 = vector.load %arg4[%c0_13, %c0_14, %c0_15] : memref<1x4x8xf32, #tpu.memory_space<vmem>>, vector<1x4x8xf32>
    tpu.vector_store %arg4[%c0_13, %c0_14, %c0_15], %50 {strides = array<i32>} : memref<1x4x8xf32, #tpu.memory_space<vmem>>, vector<1x4x8xf32>,
    return
  }
  func.func @transform_0(%arg0: i32, %arg1: i32) -> (i32, i32, i32) {
    %c0_i32 = arith.constant 0 : i32
    %c0_i32_0 = arith.constant 0 : i32
    return %arg1, %c0_i32, %arg0 : i32, i32, i32
  }
  func.func @transform_1(%arg0: i32, %arg1: i32) -> (i32, i32, i32) {
    %c0_i32 = arith.constant 0 : i32
    %c0_i32_0 = arith.constant 0 : i32
    %c0_i32_1 = arith.constant 0 : i32
    %c0_i32_2 = arith.constant 0 : i32
    return %c0_i32, %c0_i32_0, %c0_i32_1 : i32, i32, i32
  }
  func.func @transform_2(%arg0: i32, %arg1: i32) -> (i32, i32, i32) {
    %c0_i32 = arith.constant 0 : i32
    %c0_i32_0 = arith.constant 0 : i32
    return %arg1, %c0_i32, %arg0 : i32, i32, i32
  }
}

</mosaic_0001>

<llo_original>
// kernel: tpu_custom_call.1
$region0: #{tpu_custom_call.1}
  #allocation0 [shape = 'u32[]', space=smem, size = 0x4, offset = 0x4, fixed_abs, tag = 'smem constant byte address 0x4 - core index']
  #allocation1 [shape = 'u32[144,128]{1,0:T(1,128)}', space=vmem, size = 0x12000, scoped, tag = 'internal scratch']
  %s0 = inlined_call_operand.vmem [shape: f32[2,8,8], index: 0, kind: input, shape index: {}]
  %s1 = inlined_call_operand.vmem [shape: f32[4,4,1], index: 1, kind: input, shape index: {}]
  %s2 = inlined_call_operand.hbm [shape: f32[2,4,8], index: 2, kind: output, shape index: {}]
  %s3 = sld [smem:[#allocation0]]
  $region41: #{tpu_custom_call.1} parent=0
    _
  %s5 = ssub.s32 1, %s3
  %s6 = scalar_select 0, %s5, %s3
  $region1: #{tpu_custom_call.1} parent=0
    #allocation2 [shape = 'u8[4096]{0}', space=vmem, size = 0x1000, scoped, tag = 'output window, operand 0']
    #allocation3 [shape = 's32[2]{0}', space=sflag, size = 0x8, scoped, tag = 'scoped memory for tpu_custom_call.1']
    %7 = vsyncpa [#allocation3], 0
    %s8 = scalar_lea.sflag [#allocation3], 1
    %9 = vsyncpa %s8, 0
    loop: start=0, step=1, limit=4
    $region2: #{tpu_custom_call.1} parent=1 // loop_pre_header
      _
    $region3: #{tpu_custom_call.1} parent=1 // loop_header
      %s11 = sphi 0, %s15
      %p12 = scmp.ge.s32.totalorder %s11, 4
      %s18 = sphi 0, %s30
      %s19 = sphi 0, %s26
      %s20 = sphi 0, %s18
      %s21 = sphi 0, %s19
      %s22 = sphi 0, %s20
      %s23 = sphi 0, %s21
      %s35 = sphi 0, %s37
      %s38 = sphi 0, %s35
      %s39 = sphi 0, %s38
      %s55 = sphi 0, %s39
      %s59 = sphi 0, %s59
      %s61 = sphi 0, %s59
      %s62 = sphi 0, %s61
      %s76 = sphi 0, %s62
      %s84 = sphi 0, %s86
      %s87 = sphi 0, %s84
      %s88 = sphi 0, %s87
      %s104 = sphi 0, %s88
    $region4: #{tpu_custom_call.1} parent=1 // loop_header_branch
      %14 = sbr.rel (%p12) target = $region8
    $region5: #{tpu_custom_call.1} parent=1 // loop_body
      %s16 = ssub.s32 %s11, 1
      %s17 = ssub.s32 %s11, 2
      %s24 = sadd.s32 1, %s19
      %p25 = scmp.ge.s32.totalorder %s24, 2
      %s26 = scalar_select %p25, 0, %s24
      %s27 = sadd.s32 1, %s18
      %s28 = scalar_select %p25, %s27, %s18
      %p29 = scmp.ge.s32.totalorder %s28, 1
      %s30 = scalar_select %p29, 0, %s28
      %s31 = ssub.s32 %s19, %s26
      %s32 = ssub.s32 %s18, %s30
      %s33 = sor.u32 %s31, %s32
      %p34 = scmp.eq.s32.totalorder %s33, 0
      %s36 = sadd.s32 %s35, 1
      %s37 = scalar_select %p34, %s35, %s36
      %p40 = pneg %p34
      %p41 = scmp.eq.s32.totalorder %s11, 1
      %p42 = por %p40, %p41
      %p43 = scmp.ne.s32.totalorder %s35, %s38
      %p44 = scmp.eq.s32.totalorder %s11, 0
      %p45 = por %p43, %p44
      %p46 = scmp.ne.s32.totalorder %s35, %s38
      %p47 = scmp.eq.s32.totalorder %s16, 1
      %p48 = por %p46, %p47
      %p49 = scmp.ne.s32.totalorder %s38, %s39
      %p50 = scmp.eq.s32.totalorder %s16, 0
      %p51 = por %p49, %p50
      %p52 = scmp.ne.s32.totalorder %s38, %s39
      %p53 = scmp.eq.s32.totalorder %s17, 1
      %p54 = por %p52, %p53
      %p56 = scmp.ne.s32.totalorder %s39, %s55
      %p57 = scmp.eq.s32.totalorder %s17, 0
      %p58 = por %p56, %p57
      %s60 = sadd.s32 %s59, 1
      %p63 = scmp.eq.s32.totalorder %s11, 1
      %p64 = scmp.ne.s32.totalorder %s59, %s61
      %p65 = scmp.eq.s32.totalorder %s11, 0
      %p66 = por %p64, %p65
      %p67 = scmp.ne.s32.totalorder %s59, %s61
      %p68 = scmp.eq.s32.totalorder %s16, 1
      %p69 = por %p67, %p68
      %p70 = scmp.ne.s32.totalorder %s61, %s62
      %p71 = scmp.eq.s32.totalorder %s16, 0
      %p72 = por %p70, %p71
      %p73 = scmp.ne.s32.totalorder %s61, %s62
      %p74 = scmp.eq.s32.totalorder %s17, 1
      %p75 = por %p73, %p74
      %p77 = scmp.ne.s32.totalorder %s62, %s76
      %p78 = scmp.eq.s32.totalorder %s17, 0
      %p79 = por %p77, %p78
      %s80 = ssub.s32 %s19, %s26
      %s81 = ssub.s32 %s18, %s30
      %s82 = sor.u32 %s80, %s81
      %p83 = scmp.eq.s32.totalorder %s82, 0
      %s85 = sadd.s32 %s84, 1
      %s86 = scalar_select %p83, %s84, %s85
      %p89 = pneg %p83
      %p90 = scmp.eq.s32.totalorder %s11, 1
      %p91 = por %p89, %p90
      %p92 = scmp.ne.s32.totalorder %s84, %s87
      %p93 = scmp.eq.s32.totalorder %s11, 0
      %p94 = por %p92, %p93
      %p95 = scmp.ne.s32.totalorder %s84, %s87
      %p96 = scmp.eq.s32.totalorder %s16, 1
      %p97 = por %p95, %p96
      %p98 = scmp.ne.s32.totalorder %s87, %s88
      %p99 = scmp.eq.s32.totalorder %s16, 0
      %p100 = por %p98, %p99
      %p101 = scmp.ne.s32.totalorder %s87, %s88
      %p102 = scmp.eq.s32.totalorder %s17, 1
      %p103 = por %p101, %p102
      %p105 = scmp.ne.s32.totalorder %s88, %s104
      %p106 = scmp.eq.s32.totalorder %s17, 0
      %p107 = por %p105, %p106
      %p108 = scmp.le.s32.totalorder 1, %s11
      %p109 = scmp.lt.s32.totalorder %s11, 3
      %p110 = pnand %p108, %p109
      %p111 = pneg %p110
      // Predicated region
      $region9: #{tpu_custom_call.1} parent=5 // pred_check
        _
      $region10: #{tpu_custom_call.1} parent=5 // pred_check_branch
        %113 = sbr.rel (%p110) target = $region12
      $region11: #{tpu_custom_call.1} parent=5 // pred_region
        %s114 = ssub.s32 %s11, 1
        // Predicated region
        $region13: #{tpu_custom_call.1} parent=11 // pred_check
          %p115 = pneg %p72
        $region14: #{tpu_custom_call.1} parent=11 // pred_check_branch
          %117 = sbr.rel (%p115) target = $region16
        $region15: #{tpu_custom_call.1} parent=11 // pred_region
          _
        $region16: #{tpu_custom_call.1} parent=11 // pred_fallthru
          _
      $region12: #{tpu_custom_call.1} parent=5 // pred_fallthru
        _
      %p118 = scmp.lt.s32.totalorder %s11, 2
      // Predicated region
      $region17: #{tpu_custom_call.1} parent=5 // pred_check
        %p119 = pneg %p118
      $region18: #{tpu_custom_call.1} parent=5 // pred_check_branch
        %121 = sbr.rel (%p119) target = $region20
      $region19: #{tpu_custom_call.1} parent=5 // pred_region
        // Predicated region
        $region21: #{tpu_custom_call.1} parent=19 // pred_check
          %p122 = pneg %p45
        $region22: #{tpu_custom_call.1} parent=19 // pred_check_branch
          %124 = sbr.rel (%p122) target = $region24
        $region23: #{tpu_custom_call.1} parent=19 // pred_region
          %p125 = scmp.lt.s32.totalorder %s19, 1
          %s126 = scalar_select %p125, %s19, 1
          %p127 = scmp.lt.s32.totalorder %s18, 0
          %s128 = scalar_select %p127, %s18, 0
          %s129 = sadd.s32 %s128, %s126
          %s130 = smul.addr %s129, 8
          %s131 = scalar_lea.vmem %s0, %s130
        $region24: #{tpu_custom_call.1} parent=19 // pred_fallthru
          _
      $region20: #{tpu_custom_call.1} parent=5 // pred_fallthru
        _
      %p132 = scmp.le.s32.totalorder 1, %s11
      %p133 = scmp.lt.s32.totalorder %s11, 3
      %p134 = pnand %p132, %p133
      %p135 = pneg %p134
      // Predicated region
      $region25: #{tpu_custom_call.1} parent=5 // pred_check
        _
      $region26: #{tpu_custom_call.1} parent=5 // pred_check_branch
        %137 = sbr.rel (%p134) target = $region28
      $region27: #{tpu_custom_call.1} parent=5 // pred_region
        %s138 = ssub.s32 %s11, 1
        %p139 = scmp.lt.s32.totalorder %s21, 1
        %s140 = scalar_select %p139, %s21, 1
        %p141 = scmp.lt.s32.totalorder %s20, 0
        %s142 = scalar_select %p141, %s20, 0
        %s143 = sadd.s32 %s142, %s140
        %s144 = smul.addr %s143, 8
        %s145 = scalar_lea.vmem %s0, %s144
        %p146 = pneg %p51
        %p147 = pneg %p48
        %p148 = pneg %p72
        %p149 = pneg %p69
        %p150 = pneg %p100
        %p151 = pneg %p97
        %s152 = sand.u32 %s87, 1
        %s153 = scalar_lea.sflag [#allocation3], %s152
        %s154 = sand.u32 %s87, 1
        %s155 = smul.addr %s154, 4
        %s156 = scalar_lea.vmem [#allocation2], %s155
        %p157 = scmp.lt.s32.totalorder %s21, 1
        %s158 = scalar_select %p157, %s21, 1
        %p159 = scmp.lt.s32.totalorder %s20, 0
        %s160 = scalar_select %p159, %s20, 0
        %s161 = sadd.s32 %s160, %s158
        %s162 = smul.addr %s161, 8
        %s163 = scalar_lea.vmem %s0, %s162
        %v164 = vld [vmem:[%s163] ss:$2 sm:$0xf]
        %s165 = scalar_lea.vmem %s163, 1
        %v166 = vld [vmem:[%s165] ss:$2 sm:$0xf]
        %vm167 = vcmask 60416
        %v168 = vsel %vm167, %v164, 0.0
        %v169 = vrot.slane %v168, 4
        %v170 = vadd.f32 %v168, %v169
        %v171 = vrot.slane %v170, 2
        %v172 = vadd.f32 %v170, %v171
        %v173 = vrot.slane %v172, 1
        %v174 = vadd.f32 %v172, %v173
        %v175 = vsel %vm167, %v166, 0.0
        %v176 = vrot.slane %v175, 4
        %v177 = vadd.f32 %v175, %v176
        %v178 = vrot.slane %v177, 2
        %v179 = vadd.f32 %v177, %v178
        %v180 = vrot.slane %v179, 1
        %v181 = vadd.f32 %v179, %v180
        %v182 = vadd.f32 %v174, %v181
        %v183 = vmul.f32 %v182, 0.125
        %v184 = vsub.f32 %v164, %v183
        %v185 = vsub.f32 %v166, %v183
        %v186 = vmul.f32 %v184, %v184
        %v187 = vsel %vm167, %v186, 0.0
        %v188 = vrot.slane %v187, 4
        %v189 = vadd.f32 %v187, %v188
        %v190 = vrot.slane %v189, 2
        %v191 = vadd.f32 %v189, %v190
        %v192 = vrot.slane %v191, 1
        %v193 = vadd.f32 %v191, %v192
        %v194 = vmul.f32 %v185, %v185
        %v195 = vsel %vm167, %v194, 0.0
        %v196 = vrot.slane %v195, 4
        %v197 = vadd.f32 %v195, %v196
        %v198 = vrot.slane %v197, 2
        %v199 = vadd.f32 %v197, %v198
        %v200 = vrot.slane %v199, 1
        %v201 = vadd.f32 %v199, %v200
        %v202 = vadd.f32 %v193, %v201
        %v203 = vmul.f32 %v202, 0.125
        %v204 = vadd.f32 %v203, 1e-05
        %v205 = vrsqrt.pop %v204
        %v206 = vld [vmem:[%s1] sm:$0xf]
        %v207 = vld [vmem:[%s1 + $0x4] sm:$0xf]
        %v208 = vld [vmem:[%s1 + $0x8] sm:$0xf]
        %v209 = vld [vmem:[%s1 + $0xc] sm:$0xf]
        %v210 = vmul.f32 %v184, %v205
        %212 = vset.pattern.permute.xlu0 0
        %213 = vperm.xlu0 %212, %v206
        %v214 = vpop.permute.xlu0 %213
        %v216 = vmul.f32 %v210, %v214
        %218 = vset.pattern.permute.xlu0 0
        %219 = vperm.xlu0 %218, %v208
        %v220 = vpop.permute.xlu0 %219
        %v222 = vadd.f32 %v216, %v220
        %v223 = vmul.f32 %v185, %v205
        %225 = vset.pattern.permute.xlu0 0
        %226 = vperm.xlu0 %225, %v207
        %v227 = vpop.permute.xlu0 %226
        %v229 = vmul.f32 %v223, %v227
        %231 = vset.pattern.permute.xlu0 0
        %232 = vperm.xlu0 %231, %v209
        %v233 = vpop.permute.xlu0 %232
        %v235 = vadd.f32 %v229, %v233
        %v236 = vmax.f32 %v222, %v235
        %237 = vst.msk [vmem:[%s156] sm:$0xf] %vm167, %v236
        %s238 = sand.u32 %s87, 1
        %s239 = scalar_lea.sflag [#allocation3], %s238
        %s240 = sand.u32 %s87, 1
        %s241 = smul.addr %s240, 4
        %s242 = scalar_lea.vmem [#allocation2], %s241
        // Predicated region
        $region29: #{tpu_custom_call.1} parent=27 // pred_check
          %p243 = pneg %p97
        $region30: #{tpu_custom_call.1} parent=27 // pred_check_branch
          %245 = sbr.rel (%p243) target = $region32
        $region31: #{tpu_custom_call.1} parent=27 // pred_region
          %s247 = ssub.s32 64, 64
          %248 = vsyncadd %s239, %s247
          %s249 = sadd.s32 %s20, %s21
          %s250 = smul.addr %s249, 64
          %s251 = scalar_lea.hbm %s2, %s250
          %s253 = sshll.u32 %s242, 4
          %s254 = int_to_ptr.vmem [resolvable:$true] %s253
          %256 = dma.vmem_to_hbm [thread:$0]  %s254, 64, %s251, %s239
        $region32: #{tpu_custom_call.1} parent=27 // pred_fallthru
          _
      $region28: #{tpu_custom_call.1} parent=5 // pred_fallthru
        _
      %p257 = scmp.le.s32.totalorder 2, %s11
      // Predicated region
      $region33: #{tpu_custom_call.1} parent=5 // pred_check
        %p258 = pneg %p257
      $region34: #{tpu_custom_call.1} parent=5 // pred_check_branch
        %260 = sbr.rel (%p258) target = $region36
      $region35: #{tpu_custom_call.1} parent=5 // pred_region
        %s261 = ssub.s32 %s11, 2
        // Predicated region
        $region37: #{tpu_custom_call.1} parent=35 // pred_check
          %p262 = pneg %p103
        $region38: #{tpu_custom_call.1} parent=35 // pred_check_branch
          %264 = sbr.rel (%p262) target = $region40
        $region39: #{tpu_custom_call.1} parent=35 // pred_region
          %s265 = sand.u32 %s88, 1
          %s266 = scalar_lea.sflag [#allocation3], %s265
          %s267 = sand.u32 %s88, 1
          %s268 = smul.addr %s267, 4
          %s269 = scalar_lea.vmem [#allocation2], %s268
          %270 = dma.done %s266, 64
        $region40: #{tpu_custom_call.1} parent=35 // pred_fallthru
          _
      $region36: #{tpu_custom_call.1} parent=5 // pred_fallthru
        _
    $region6: #{tpu_custom_call.1} parent=1 // loop_footer
      %s15 = sadd.s32 1, %s11
    $region7: #{tpu_custom_call.1} parent=1 // loop_footer_branch
      %10 = sbr.rel target = $region3
    $region8: #{tpu_custom_call.1} parent=1 // loop_exit
      _
    %271 = vsyncpa [#allocation3], 1
    %s272 = scalar_lea.sflag [#allocation3], 1
    %273 = vsyncpa %s272, 1

</llo_original>
